<compile_context>
chip_gen: v5e
topology: v5e:2x2
jax: 0.10.0
libtpu: 0.0.40
codegen_flags: <defaults>
</compile_context>

<pallas_src>
import jax
import jax.numpy as jnp
from jax import lax
from jax.experimental import pallas as pl
from jax.experimental.pallas import tpu as pltpu

_LANE = 128
_SUBLANE = 8
_NEG_INF = -1e30  # additive mask for padded key positions (finite: no inf-inf)


def _round_up(x, m):
    return ((x + m - 1) // m) * m


def _vmem_capacity_bytes():
    """Per-core VMEM capacity; conservative fallback when not queryable."""
    try:
        info = pltpu.get_tpu_info()
        cap = getattr(info, "vmem_capacity_bytes", None)
        if cap:
            return int(cap)
    except Exception:  # pragma: no cover - non-TPU / interpret environments
        pass
    return 64 * 1024 * 1024


def _attention_kernel(q_ref, k_ref, v_ref, m_ref, score_ref, ctx_ref,
                      *weight_refs):
    # One grid step == (one batch element, one Tq tile).  q/k/v already carry
    # the matmul dtype (cast in the wrapper).
    q = q_ref[0]          # (TQ, Dp)
    k = k_ref[0]          # (Tkp, Dp)
    m = m_ref[0]          # (1, Tkp) -> broadcasts over TQ

    # _score: dot-product logits.  Contract on D of both operands (no k.T,
    # no XLU transpose); f32 accumulation on the MXU.
    w = lax.dot_general(q, k,
                        dimension_numbers=(((1,), (1,)), ((), ())),
                        preferred_element_type=jnp.float32)    # (TQ, Tkp)
    # weight = weight + mask.unsqueeze(1).expand_as(weight)
    w = w + m

    # score = softmax(weight, dim=-1); numerically stable; exact divide since
    # score is a user-visible output (approx reciprocal broke 1e-3 numerics).
    w_max = jnp.max(w, axis=-1, keepdims=True)
    e = jnp.exp(w - w_max)
    denom = jnp.sum(e, axis=-1, keepdims=True)
    s = e / denom                                              # (TQ, Tkp)

    # ctx = bmm(score, values); f32 accumulation on the MXU.
    ctx = lax.dot_general(s.astype(v_ref.dtype), v_ref[0],
                          dimension_numbers=(((1,), (0,)), ((), ())),
                          preferred_element_type=jnp.float32)  # (TQ, Dvp)

    score_ref[0] = s.astype(score_ref.dtype)
    ctx_ref[0] = ctx.astype(ctx_ref.dtype)
    if weight_refs:  # only materialize logits when return_logits=True
        w_ref, = weight_refs
        w_ref[0] = w.astype(w_ref.dtype)


def _choose_tq_tile(tq, tkp, dp, dvp, emit_weight, in_itemsize,
                    score_itemsize, ctx_itemsize, weight_itemsize, vmem_bytes):
    """Largest Tq tile whose double-buffered footprint fits ~70% of per-core
    VMEM.  Floor of 128 when Tq >= 128 so the MXU stays reasonably filled."""
    budget = int(vmem_bytes * 0.70)
    tq8 = _round_up(tq, _SUBLANE)
    if tq8 <= _LANE:
        candidates = (tq8,)
    else:
        candidates = tuple(t for t in (2048, 1024, 512, 256, 128) if t <= tq8)
        if not candidates:
            candidates = (_LANE,)

    def footprint(t):
        # 2x factors = double-buffered DMA windows; intermediates are f32.
        fixed = 2 * (tkp * dp + tkp * dvp) * in_itemsize + 2 * tkp * 4  # k,v,mask
        per_q = 2 * (t * dp * in_itemsize + t * tkp * score_itemsize
                     + t * dvp * ctx_itemsize)                          # q,score,ctx
        if emit_weight:
            per_q += 2 * t * tkp * weight_itemsize                      # weight
        inter = 4 * t * tkp * 4                                         # w,e,s,tmp
        return fixed + per_q + inter

    for t in candidates:
        fp = footprint(t)
        if fp <= budget:
            return t, fp
    # TODO(synk): if even the >=128 floor tile blows the budget, switch to the
    #             flash-style online-softmax kernel rather than shrinking M.
    t = candidates[-1]
    return t, footprint(t)


def attention_base_forward(query, keys, values, mask=None, return_logits=False,
                           matmul_dtype=jnp.bfloat16, score_dtype=None):
    B, Tq, D = query.shape
    Bk, Tk, Dk = keys.shape
    Bv, Tkv, Dv = values.shape
    assert B == Bk == Bv and Tk == Tkv and D == Dk

    out_dtype = query.dtype                       # ctx (and default score) dtype
    score_dtype = out_dtype if score_dtype is None else score_dtype
    weight_dtype = out_dtype
    in_itemsize = jnp.dtype(matmul_dtype).itemsize

    # --- lane-dense padding: last dims -> multiple of 128, Tq -> tile multiple.
    dp = _round_up(D, _LANE)
    dvp = _round_up(Dv, _LANE)
    tkp = _round_up(Tk, _LANE)

    vmem_cap = _vmem_capacity_bytes()
    tq_tile, footprint = _choose_tq_tile(
        Tq, tkp, dp, dvp, return_logits, in_itemsize,
        jnp.dtype(score_dtype).itemsize, jnp.dtype(out_dtype).itemsize,
        jnp.dtype(weight_dtype).itemsize, vmem_cap)
    tqp = _round_up(Tq, tq_tile)
    n_q = tqp // tq_tile

    # Padded key positions get a large negative additive mask so they vanish
    # in the softmax; semantics of the original (unpadded) problem preserved.
    if mask is None:
        mask = jnp.zeros((B, Tk), dtype=jnp.float32)
    mask3 = mask.astype(jnp.float32).reshape(B, 1, Tk)
    if tkp != Tk:
        mask3 = jnp.pad(mask3, ((0, 0), (0, 0), (0, tkp - Tk)),
                        constant_values=_NEG_INF)

    def _pad_cast(x, row_pad, col_pad):
        # Fuse the matmul-dtype cast into the padding copy; skip no-op pads.
        if x.dtype != matmul_dtype:
            x = x.astype(matmul_dtype)
        if row_pad or col_pad:
            x = jnp.pad(x, ((0, 0), (0, row_pad), (0, col_pad)))
        return x

    qp = _pad_cast(query, tqp - Tq, dp - D)
    kp = _pad_cast(keys, tkp - Tk, dp - D)
    vp = _pad_cast(values, tkp - Tk, dvp - Dv)

    # --- specs
    in_specs = [
        pl.BlockSpec((1, tq_tile, dp), lambda b, i: (b, i, 0)),   # q (tiled over Tq)
        pl.BlockSpec((1, tkp, dp), lambda b, i: (b, 0, 0)),       # k (resident)
        pl.BlockSpec((1, tkp, dvp), lambda b, i: (b, 0, 0)),      # v (resident)
        pl.BlockSpec((1, 1, tkp), lambda b, i: (b, 0, 0)),        # mask
    ]
    out_shapes = [
        jax.ShapeDtypeStruct((B, tqp, tkp), score_dtype),         # score
        jax.ShapeDtypeStruct((B, tqp, dvp), out_dtype),           # ctx
    ]
    out_specs = [
        pl.BlockSpec((1, tq_tile, tkp), lambda b, i: (b, i, 0)),
        pl.BlockSpec((1, tq_tile, dvp), lambda b, i: (b, i, 0)),
    ]
    if return_logits:
        out_shapes.append(jax.ShapeDtypeStruct((B, tqp, tkp), weight_dtype))
        out_specs.append(pl.BlockSpec((1, tq_tile, tkp), lambda b, i: (b, i, 0)))

    # Scoped-VMEM: footprint already carries the double-buffer factors, so just
    # add a small compiler-scratch margin; cap per generation.
    hard_cap = (56 << 20) if vmem_cap <= (64 << 20) else (110 << 20)
    vmem_limit = int(min(hard_cap, max(32 << 20, footprint + (4 << 20))))

    grid_spec = pltpu.PrefetchScalarGridSpec(
        num_scalar_prefetch=0,
        grid=(B, n_q),
        in_specs=in_specs,
        out_specs=out_specs,
    )

    outs = pl.pallas_call(
        _attention_kernel,
        out_shape=tuple(out_shapes),
        grid_spec=grid_spec,
        compiler_params=pltpu.CompilerParams(
            dimension_semantics=("parallel", "parallel"),
            vmem_limit_bytes=vmem_limit),
    )(qp, kp, vp, mask3)

    def _crop(x, rows, cols):
        if x.shape[1] != rows or x.shape[2] != cols:
            x = x[:, :rows, :cols]
        return x

    score = _crop(outs[0], Tq, Tk)
    ctx = _crop(outs[1], Tq, Dv)
    if return_logits:
        weight = _crop(outs[2], Tq, Tk)
        return score, ctx, weight
    return score, ctx


def _reference(query, keys, values, mask):
    hi = lax.Precision.HIGHEST
    w = jnp.einsum("bqd,bkd->bqk", query, keys, precision=hi)
    w = w + mask[:, None, :]
    s = jax.nn.softmax(w, axis=-1)
    ctx = jnp.einsum("bqk,bkd->bqd", s, values, precision=hi)
    return s, ctx, w


if __name__ == "__main__":
    # ---------------- small canonical case ----------------
    B, Tq, Tk, D, Dv = 2, 8, 8, 32, 32
    key = jax.random.PRNGKey(0)
    kq, kk, kv, km = jax.random.split(key, 4)
    query = jax.random.normal(kq, (B, Tq, D), dtype=jnp.float32)
    keys = jax.random.normal(kk, (B, Tk, D), dtype=jnp.float32)
    values = jax.random.normal(kv, (B, Tk, Dv), dtype=jnp.float32)
    # additive mask (e.g. padding): -1e9 on the last key position of batch 1
    mask = jnp.zeros((B, Tk), dtype=jnp.float32).at[1, -1].set(-1e9)

    s_ref, c_ref, w_ref = _reference(query, keys, values, mask)

    # 1) full-precision path (f32 matmuls, exact softmax): tight check.
    score, ctx, weight = attention_base_forward(
        query, keys, values, mask=mask, return_logits=True,
        matmul_dtype=jnp.float32)
    jax.block_until_ready((score, ctx, weight))
    assert jnp.allclose(weight, w_ref, atol=1e-3, rtol=1e-3)
    assert jnp.allclose(score, s_ref, atol=1e-3, rtol=1e-3)
    assert jnp.allclose(ctx, c_ref, atol=1e-3, rtol=1e-3)

    # 2) default fast path (bf16 MXU inputs cast in the wrapper, f32 accum).
    score_bf, ctx_bf = attention_base_forward(query, keys, values, mask=mask)
    jax.block_until_ready((score_bf, ctx_bf))
    assert jnp.allclose(score_bf, s_ref, atol=7e-2, rtol=7e-2)
    assert jnp.allclose(ctx_bf, c_ref, atol=1.5e-1, rtol=7e-2)

    # ---------------- multi-tile / padded case (exercises Tq tiling) --------
    B2, Tq2, Tk2, D2, Dv2 = 2, 300, 160, 64, 48
    k2 = jax.random.split(jax.random.PRNGKey(1), 3)
    q2 = jax.random.normal(k2[0], (B2, Tq2, D2), dtype=jnp.float32)
    ks2 = jax.random.normal(k2[1], (B2, Tk2, D2), dtype=jnp.float32)
    v2 = jax.random.normal(k2[2], (B2, Tk2, Dv2), dtype=jnp.float32)
    s2_ref, c2_ref, _ = _reference(q2, ks2, v2, jnp.zeros((B2, Tk2), jnp.float32))
    s2, c2 = attention_base_forward(q2, ks2, v2, mask=None,
                                    matmul_dtype=jnp.float32)
    jax.block_until_ready((s2, c2))
    assert jnp.allclose(s2, s2_ref, atol=1e-3, rtol=1e-3)
    assert jnp.allclose(c2, c2_ref, atol=1e-3, rtol=1e-3)

    print("KERNEL_OK")
</pallas_src>

<mosaic_0001>
module attributes {stable_mosaic.version = 11 : i64} {
  func.func @_attention_kernel(%arg0: i32, %arg1: i32, %arg2: memref<1x8x128xf32, #tpu.memory_space<vmem>>, %arg3: memref<1x128x128xf32, #tpu.memory_space<vmem>>, %arg4: memref<1x128x128xf32, #tpu.memory_space<vmem>>, %arg5: memref<1x1x128xf32, #tpu.memory_space<vmem>>, %arg6: memref<1x8x128xf32, #tpu.memory_space<vmem>>, %arg7: memref<1x8x128xf32, #tpu.memory_space<vmem>>, %arg8: memref<1x8x128xf32, #tpu.memory_space<vmem>>) attributes {dimension_semantics = [#tpu.dimension_semantics<parallel>, #tpu.dimension_semantics<parallel>], iteration_bounds = array<i64: 2, 1>, scalar_prefetch = 0 : i64, scratch_operands = 0 : i64, tpu.core_type = #tpu.core_type<tc>, window_params = [{transform_indices = @transform_0, window_bounds = array<i64: 1, 8, 128>}, {transform_indices = @transform_1, window_bounds = array<i64: 1, 128, 128>}, {transform_indices = @transform_2, window_bounds = array<i64: 1, 128, 128>}, {transform_indices = @transform_3, window_bounds = array<i64: 1, 1, 128>}, {transform_indices = @transform_4, window_bounds = array<i64: 1, 8, 128>}, {transform_indices = @transform_5, window_bounds = array<i64: 1, 8, 128>}, {transform_indices = @transform_6, window_bounds = array<i64: 1, 8, 128>}]} {
    %c0 = arith.constant 0 : index
    %c0_0 = arith.constant 0 : index
    %c0_1 = arith.constant 0 : index
    %0 = vector.load %arg2[%c0, %c0_0, %c0_1] : memref<1x8x128xf32, #tpu.memory_space<vmem>>, vector<1x8x128xf32>
    %1 = vector.shape_cast %0 : vector<1x8x128xf32> to vector<8x128xf32>
    %c0_2 = arith.constant 0 : index
    %c0_3 = arith.constant 0 : index
    %c0_4 = arith.constant 0 : index
    %2 = vector.load %arg3[%c0_2, %c0_3, %c0_4] : memref<1x128x128xf32, #tpu.memory_space<vmem>>, vector<1x128x128xf32>
    %3 = vector.shape_cast %2 : vector<1x128x128xf32> to vector<128x128xf32>
    %c0_5 = arith.constant 0 : index
    %c0_6 = arith.constant 0 : index
    %c0_7 = arith.constant 0 : index
    %4 = vector.load %arg5[%c0_5, %c0_6, %c0_7] : memref<1x1x128xf32, #tpu.memory_space<vmem>>, vector<1x1x128xf32>
    %5 = vector.shape_cast %4 : vector<1x1x128xf32> to vector<1x128xf32>
    %cst = arith.constant dense<0.000000e+00> : vector<8x128xf32>
    %6 = tpu.matmul %1, %3, %cst {dimension_numbers = #tpu.dot_dimension_numbers<[1], [1], [0], [0], [0, 0, 1, 0], [], []>} : vector<8x128xf32>, vector<128x128xf32>, vector<8x128xf32> -> vector<8x128xf32>
    %7 = vector.broadcast %5 : vector<1x128xf32> to vector<8x128xf32>
    %8 = arith.addf %6, %7 : vector<8x128xf32>
    %cst_8 = arith.constant dense<0xFF800000> : vector<8xf32>
    %9 = vector.multi_reduction <maximumf>, %8, %cst_8 [1] : vector<8x128xf32> to vector<8xf32>
    %10 = vector.shape_cast %9 : vector<8xf32> to vector<8x1xf32>
    %11 = vector.broadcast %10 : vector<8x1xf32> to vector<8x128xf32>
    %12 = arith.subf %8, %11 : vector<8x128xf32>
    %13 = math.exp %12 : vector<8x128xf32>
    %cst_9 = arith.constant dense<0.000000e+00> : vector<8xf32>
    %14 = vector.multi_reduction <add>, %13, %cst_9 [1] : vector<8x128xf32> to vector<8xf32>
    %15 = vector.shape_cast %14 : vector<8xf32> to vector<8x1xf32>
    %16 = vector.broadcast %15 : vector<8x1xf32> to vector<8x128xf32>
    %17 = arith.divf %13, %16 : vector<8x128xf32>
    %c0_10 = arith.constant 0 : index
    %c0_11 = arith.constant 0 : index
    %c0_12 = arith.constant 0 : index
    %18 = vector.load %arg4[%c0_10, %c0_11, %c0_12] : memref<1x128x128xf32, #tpu.memory_space<vmem>>, vector<1x128x128xf32>
    %19 = vector.shape_cast %18 : vector<1x128x128xf32> to vector<128x128xf32>
    %cst_13 = arith.constant dense<0.000000e+00> : vector<8x128xf32>
    %20 = tpu.matmul %17, %19, %cst_13 {dimension_numbers = #tpu.dot_dimension_numbers<[1], [0], [0], [1], [0, 0, 1, 1], [], []>} : vector<8x128xf32>, vector<128x128xf32>, vector<8x128xf32> -> vector<8x128xf32>
    %c0_14 = arith.constant 0 : index
    %c0_15 = arith.constant 0 : index
    %c0_16 = arith.constant 0 : index
    %21 = vector.load %arg6[%c0_14, %c0_15, %c0_16] : memref<1x8x128xf32, #tpu.memory_space<vmem>>, vector<1x8x128xf32>
    %22 = vector.shape_cast %21 : vector<1x8x128xf32> to vector<8x128xf32>
    %23 = vector.shape_cast %17 : vector<8x128xf32> to vector<1x8x128xf32>
    tpu.vector_store %arg6[%c0_14, %c0_15, %c0_16], %23 {strides = array<i32>} : memref<1x8x128xf32, #tpu.memory_space<vmem>>, vector<1x8x128xf32>,
    %c0_17 = arith.constant 0 : index
    %c0_18 = arith.constant 0 : index
    %c0_19 = arith.constant 0 : index
    %24 = vector.load %arg7[%c0_17, %c0_18, %c0_19] : memref<1x8x128xf32, #tpu.memory_space<vmem>>, vector<1x8x128xf32>
    %25 = vector.shape_cast %24 : vector<1x8x128xf32> to vector<8x128xf32>
    %26 = vector.shape_cast %20 : vector<8x128xf32> to vector<1x8x128xf32>
    tpu.vector_store %arg7[%c0_17, %c0_18, %c0_19], %26 {strides = array<i32>} : memref<1x8x128xf32, #tpu.memory_space<vmem>>, vector<1x8x128xf32>,
    %c0_20 = arith.constant 0 : index
    %c0_21 = arith.constant 0 : index
    %c0_22 = arith.constant 0 : index
    %27 = vector.load %arg8[%c0_20, %c0_21, %c0_22] : memref<1x8x128xf32, #tpu.memory_space<vmem>>, vector<1x8x128xf32>
    %28 = vector.shape_cast %27 : vector<1x8x128xf32> to vector<8x128xf32>
    %29 = vector.shape_cast %8 : vector<8x128xf32> to vector<1x8x128xf32>
    tpu.vector_store %arg8[%c0_20, %c0_21, %c0_22], %29 {strides = array<i32>} : memref<1x8x128xf32, #tpu.memory_space<vmem>>, vector<1x8x128xf32>,
    return
  }
  func.func @transform_0(%arg0: i32, %arg1: i32) -> (i32, i32, i32) {
    %c0_i32 = arith.constant 0 : i32
    %c0_i32_0 = arith.constant 0 : i32
    return %arg0, %arg1, %c0_i32 : i32, i32, i32
  }
  func.func @transform_1(%arg0: i32, %arg1: i32) -> (i32, i32, i32) {
    %c0_i32 = arith.constant 0 : i32
    %c0_i32_0 = arith.constant 0 : i32
    %c0_i32_1 = arith.constant 0 : i32
    return %arg0, %c0_i32, %c0_i32_0 : i32, i32, i32
  }
  func.func @transform_2(%arg0: i32, %arg1: i32) -> (i32, i32, i32) {
    %c0_i32 = arith.constant 0 : i32
    %c0_i32_0 = arith.constant 0 : i32
    %c0_i32_1 = arith.constant 0 : i32
    return %arg0, %c0_i32, %c0_i32_0 : i32, i32, i32
  }
  func.func @transform_3(%arg0: i32, %arg1: i32) -> (i32, i32, i32) {
    %c0_i32 = arith.constant 0 : i32
    %c0_i32_0 = arith.constant 0 : i32
    %c0_i32_1 = arith.constant 0 : i32
    return %arg0, %c0_i32, %c0_i32_0 : i32, i32, i32
  }
  func.func @transform_4(%arg0: i32, %arg1: i32) -> (i32, i32, i32) {
    %c0_i32 = arith.constant 0 : i32
    %c0_i32_0 = arith.constant 0 : i32
    return %arg0, %arg1, %c0_i32 : i32, i32, i32
  }
  func.func @transform_5(%arg0: i32, %arg1: i32) -> (i32, i32, i32) {
    %c0_i32 = arith.constant 0 : i32
    %c0_i32_0 = arith.constant 0 : i32
    return %arg0, %arg1, %c0_i32 : i32, i32, i32
  }
  func.func @transform_6(%arg0: i32, %arg1: i32) -> (i32, i32, i32) {
    %c0_i32 = arith.constant 0 : i32
    %c0_i32_0 = arith.constant 0 : i32
    return %arg0, %arg1, %c0_i32 : i32, i32, i32
  }
}

</mosaic_0001>

<llo_original>
// kernel: tpu_custom_call.1
$region0: #{tpu_custom_call.1}
  #allocation0 [shape = 'u32[]', space=smem, size = 0x4, offset = 0x4, fixed_abs, tag = 'smem constant byte address 0x4 - core index']
  #allocation1 [shape = 'u32[72,128]{1,0:T(1,128)}', space=vmem, size = 0x9000, scoped, tag = 'internal scratch']
  %s0 = inlined_call_operand.hbm [shape: f32[2,8,128], index: 0, kind: input, shape index: {}]
  %s1 = inlined_call_operand.hbm [shape: f32[2,128,128], index: 1, kind: input, shape index: {}]
  %s2 = inlined_call_operand.hbm [shape: f32[2,128,128], index: 2, kind: input, shape index: {}]
  %s3 = inlined_call_operand.vmem [shape: f32[2,1,128], index: 3, kind: input, shape index: {}]
  %s4 = inlined_call_operand.hbm [shape: f32[2,8,128], index: 4, kind: output, shape index: {0}]
  %s5 = inlined_call_operand.hbm [shape: f32[2,8,128], index: 5, kind: output, shape index: {1}]
  %s6 = inlined_call_operand.hbm [shape: f32[2,8,128], index: 6, kind: output, shape index: {2}]
  %7 = xla_tuple %s4, %s5, %s6
  %s8 = sld [smem:[#allocation0]]
  $region77: #{tpu_custom_call.1} parent=0
    _
  %s10 = ssub.s32 1, %s8
  %s11 = scalar_select 0, %s10, %s8
  $region1: #{tpu_custom_call.1} parent=0
    #allocation2 [shape = 'u8[8192]{0}', space=vmem, size = 0x2000, scoped, tag = 'input window, operand 0']
    #allocation3 [shape = 's32[2]{0}', space=sflag, size = 0x8, scoped, tag = 'scoped memory for tpu_custom_call.1']
    #allocation4 [shape = 's32[2]{0}', space=sflag, size = 0x8, scoped, tag = 'scoped memory for tpu_custom_call.1']
    #allocation5 [shape = 'u8[131072]{0}', space=vmem, size = 0x20000, scoped, tag = 'input window, operand 1']
    #allocation6 [shape = 's32[2]{0}', space=sflag, size = 0x8, scoped, tag = 'scoped memory for tpu_custom_call.1']
    #allocation7 [shape = 'u8[131072]{0}', space=vmem, size = 0x20000, scoped, tag = 'input window, operand 2']
    #allocation8 [shape = 'u8[8192]{0}', space=vmem, size = 0x2000, scoped, tag = 'output window, operand 0']
    #allocation9 [shape = 'u8[8192]{0}', space=vmem, size = 0x2000, scoped, tag = 'output window, operand 1']
    #allocation10 [shape = 's32[2]{0}', space=sflag, size = 0x8, scoped, tag = 'scoped memory for tpu_custom_call.1']
    #allocation11 [shape = 'u8[8192]{0}', space=vmem, size = 0x2000, scoped, tag = 'output window, operand 2']
    %12 = vsyncpa [#allocation3], 0
    %s13 = scalar_lea.sflag [#allocation3], 1
    %14 = vsyncpa %s13, 0
    %15 = vsyncpa [#allocation6], 0
    %s16 = scalar_lea.sflag [#allocation6], 1
    %17 = vsyncpa %s16, 0
    %18 = vsyncpa [#allocation4], 0
    %s19 = scalar_lea.sflag [#allocation4], 1
    %20 = vsyncpa %s19, 0
    %21 = vsyncpa [#allocation10], 0
    %s22 = scalar_lea.sflag [#allocation10], 1
    %23 = vsyncpa %s22, 0
    loop: start=0, step=1, limit=4
    $region2: #{tpu_custom_call.1} parent=1 // loop_pre_header
      _
    $region3: #{tpu_custom_call.1} parent=1 // loop_header
      %s25 = sphi 0, %s29
      %p26 = scmp.ge.s32.totalorder %s25, 4
      %s32 = sphi 0, %s44
      %s33 = sphi 0, %s40
      %s34 = sphi 0, %s32
      %s35 = sphi 0, %s33
      %s36 = sphi 0, %s34
      %s37 = sphi 0, %s35
      %s49 = sphi 0, %s51
      %s52 = sphi 0, %s49
      %s53 = sphi 0, %s52
      %s69 = sphi 0, %s53
      %s75 = sphi 0, %s77
      %s78 = sphi 0, %s75
      %s79 = sphi 0, %s78
      %s95 = sphi 0, %s79
      %s101 = sphi 0, %s103
      %s104 = sphi 0, %s101
      %s105 = sphi 0, %s104
      %s121 = sphi 0, %s105
      %s127 = sphi 0, %s129
      %s130 = sphi 0, %s127
      %s131 = sphi 0, %s130
      %s147 = sphi 0, %s131
      %s155 = sphi 0, %s157
      %s158 = sphi 0, %s155
      %s159 = sphi 0, %s158
      %s175 = sphi 0, %s159
      %s183 = sphi 0, %s185
      %s186 = sphi 0, %s183
      %s187 = sphi 0, %s186
      %s203 = sphi 0, %s187
      %s211 = sphi 0, %s213
      %s214 = sphi 0, %s211
      %s215 = sphi 0, %s214
      %s231 = sphi 0, %s215
    $region4: #{tpu_custom_call.1} parent=1 // loop_header_branch
      %28 = sbr.rel (%p26) target = $region8
    $region5: #{tpu_custom_call.1} parent=1 // loop_body
      %s30 = ssub.s32 %s25, 1
      %s31 = ssub.s32 %s25, 2
      %s38 = sadd.s32 1, %s33
      %p39 = scmp.ge.s32.totalorder %s38, 1
      %s40 = scalar_select %p39, 0, %s38
      %s41 = sadd.s32 1, %s32
      %s42 = scalar_select %p39, %s41, %s32
      %p43 = scmp.ge.s32.totalorder %s42, 2
      %s44 = scalar_select %p43, 0, %s42
      %s45 = ssub.s32 %s32, %s44
      %s46 = ssub.s32 %s33, %s40
      %s47 = sor.u32 %s45, %s46
      %p48 = scmp.eq.s32.totalorder %s47, 0
      %s50 = sadd.s32 %s49, 1
      %s51 = scalar_select %p48, %s49, %s50
      %p54 = pneg %p48
      %p55 = scmp.eq.s32.totalorder %s25, 1
      %p56 = por %p54, %p55
      %p57 = scmp.ne.s32.totalorder %s49, %s52
      %p58 = scmp.eq.s32.totalorder %s25, 0
      %p59 = por %p57, %p58
      %p60 = scmp.ne.s32.totalorder %s49, %s52
      %p61 = scmp.eq.s32.totalorder %s30, 1
      %p62 = por %p60, %p61
      %p63 = scmp.ne.s32.totalorder %s52, %s53
      %p64 = scmp.eq.s32.totalorder %s30, 0
      %p65 = por %p63, %p64
      %p66 = scmp.ne.s32.totalorder %s52, %s53
      %p67 = scmp.eq.s32.totalorder %s31, 1
      %p68 = por %p66, %p67
      %p70 = scmp.ne.s32.totalorder %s53, %s69
      %p71 = scmp.eq.s32.totalorder %s31, 0
      %p72 = por %p70, %p71
      %s73 = ssub.s32 %s32, %s44
      %p74 = scmp.eq.s32.totalorder %s73, 0
      %s76 = sadd.s32 %s75, 1
      %s77 = scalar_select %p74, %s75, %s76
      %p80 = pneg %p74
      %p81 = scmp.eq.s32.totalorder %s25, 1
      %p82 = por %p80, %p81
      %p83 = scmp.ne.s32.totalorder %s75, %s78
      %p84 = scmp.eq.s32.totalorder %s25, 0
      %p85 = por %p83, %p84
      %p86 = scmp.ne.s32.totalorder %s75, %s78
      %p87 = scmp.eq.s32.totalorder %s30, 1
      %p88 = por %p86, %p87
      %p89 = scmp.ne.s32.totalorder %s78, %s79
      %p90 = scmp.eq.s32.totalorder %s30, 0
      %p91 = por %p89, %p90
      %p92 = scmp.ne.s32.totalorder %s78, %s79
      %p93 = scmp.eq.s32.totalorder %s31, 1
      %p94 = por %p92, %p93
      %p96 = scmp.ne.s32.totalorder %s79, %s95
      %p97 = scmp.eq.s32.totalorder %s31, 0
      %p98 = por %p96, %p97
      %s99 = ssub.s32 %s32, %s44
      %p100 = scmp.eq.s32.totalorder %s99, 0
      %s102 = sadd.s32 %s101, 1
      %s103 = scalar_select %p100, %s101, %s102
      %p106 = pneg %p100
      %p107 = scmp.eq.s32.totalorder %s25, 1
      %p108 = por %p106, %p107
      %p109 = scmp.ne.s32.totalorder %s101, %s104
      %p110 = scmp.eq.s32.totalorder %s25, 0
      %p111 = por %p109, %p110
      %p112 = scmp.ne.s32.totalorder %s101, %s104
      %p113 = scmp.eq.s32.totalorder %s30, 1
      %p114 = por %p112, %p113
      %p115 = scmp.ne.s32.totalorder %s104, %s105
      %p116 = scmp.eq.s32.totalorder %s30, 0
      %p117 = por %p115, %p116
      %p118 = scmp.ne.s32.totalorder %s104, %s105
      %p119 = scmp.eq.s32.totalorder %s31, 1
      %p120 = por %p118, %p119
      %p122 = scmp.ne.s32.totalorder %s105, %s121
      %p123 = scmp.eq.s32.totalorder %s31, 0
      %p124 = por %p122, %p123
      %s125 = ssub.s32 %s32, %s44
      %p126 = scmp.eq.s32.totalorder %s125, 0
      %s128 = sadd.s32 %s127, 1
      %s129 = scalar_select %p126, %s127, %s128
      %p132 = pneg %p126
      %p133 = scmp.eq.s32.totalorder %s25, 1
      %p134 = por %p132, %p133
      %p135 = scmp.ne.s32.totalorder %s127, %s130
      %p136 = scmp.eq.s32.totalorder %s25, 0
      %p137 = por %p135, %p136
      %p138 = scmp.ne.s32.totalorder %s127, %s130
      %p139 = scmp.eq.s32.totalorder %s30, 1
      %p140 = por %p138, %p139
      %p141 = scmp.ne.s32.totalorder %s130, %s131
      %p142 = scmp.eq.s32.totalorder %s30, 0
      %p143 = por %p141, %p142
      %p144 = scmp.ne.s32.totalorder %s130, %s131
      %p145 = scmp.eq.s32.totalorder %s31, 1
      %p146 = por %p144, %p145
      %p148 = scmp.ne.s32.totalorder %s131, %s147
      %p149 = scmp.eq.s32.totalorder %s31, 0
      %p150 = por %p148, %p149
      %s151 = ssub.s32 %s32, %s44
      %s152 = ssub.s32 %s33, %s40
      %s153 = sor.u32 %s151, %s152
      %p154 = scmp.eq.s32.totalorder %s153, 0
      %s156 = sadd.s32 %s155, 1
      %s157 = scalar_select %p154, %s155, %s156
      %p160 = pneg %p154
      %p161 = scmp.eq.s32.totalorder %s25, 1
      %p162 = por %p160, %p161
      %p163 = scmp.ne.s32.totalorder %s155, %s158
      %p164 = scmp.eq.s32.totalorder %s25, 0
      %p165 = por %p163, %p164
      %p166 = scmp.ne.s32.totalorder %s155, %s158
      %p167 = scmp.eq.s32.totalorder %s30, 1
      %p168 = por %p166, %p167
      %p169 = scmp.ne.s32.totalorder %s158, %s159
      %p170 = scmp.eq.s32.totalorder %s30, 0
      %p171 = por %p169, %p170
      %p172 = scmp.ne.s32.totalorder %s158, %s159
      %p173 = scmp.eq.s32.totalorder %s31, 1
      %p174 = por %p172, %p173
      %p176 = scmp.ne.s32.totalorder %s159, %s175
      %p177 = scmp.eq.s32.totalorder %s31, 0
      %p178 = por %p176, %p177
      %s179 = ssub.s32 %s32, %s44
      %s180 = ssub.s32 %s33, %s40
      %s181 = sor.u32 %s179, %s180
      %p182 = scmp.eq.s32.totalorder %s181, 0
      %s184 = sadd.s32 %s183, 1
      %s185 = scalar_select %p182, %s183, %s184
      %p188 = pneg %p182
      %p189 = scmp.eq.s32.totalorder %s25, 1
      %p190 = por %p188, %p189
      %p191 = scmp.ne.s32.totalorder %s183, %s186
      %p192 = scmp.eq.s32.totalorder %s25, 0
      %p193 = por %p191, %p192
      %p194 = scmp.ne.s32.totalorder %s183, %s186
      %p195 = scmp.eq.s32.totalorder %s30, 1
      %p196 = por %p194, %p195
      %p197 = scmp.ne.s32.totalorder %s186, %s187
      %p198 = scmp.eq.s32.totalorder %s30, 0
      %p199 = por %p197, %p198
      %p200 = scmp.ne.s32.totalorder %s186, %s187
      %p201 = scmp.eq.s32.totalorder %s31, 1
      %p202 = por %p200, %p201
      %p204 = scmp.ne.s32.totalorder %s187, %s203
      %p205 = scmp.eq.s32.totalorder %s31, 0
      %p206 = por %p204, %p205
      %s207 = ssub.s32 %s32, %s44
      %s208 = ssub.s32 %s33, %s40
      %s209 = sor.u32 %s207, %s208
      %p210 = scmp.eq.s32.totalorder %s209, 0
      %s212 = sadd.s32 %s211, 1
      %s213 = scalar_select %p210, %s211, %s212
      %p216 = pneg %p210
      %p217 = scmp.eq.s32.totalorder %s25, 1
      %p218 = por %p216, %p217
      %p219 = scmp.ne.s32.totalorder %s211, %s214
      %p220 = scmp.eq.s32.totalorder %s25, 0
      %p221 = por %p219, %p220
      %p222 = scmp.ne.s32.totalorder %s211, %s214
      %p223 = scmp.eq.s32.totalorder %s30, 1
      %p224 = por %p222, %p223
      %p225 = scmp.ne.s32.totalorder %s214, %s215
      %p226 = scmp.eq.s32.totalorder %s30, 0
      %p227 = por %p225, %p226
      %p228 = scmp.ne.s32.totalorder %s214, %s215
      %p229 = scmp.eq.s32.totalorder %s31, 1
      %p230 = por %p228, %p229
      %p232 = scmp.ne.s32.totalorder %s215, %s231
      %p233 = scmp.eq.s32.totalorder %s31, 0
      %p234 = por %p232, %p233
      %p235 = scmp.le.s32.totalorder 1, %s25
      %p236 = scmp.lt.s32.totalorder %s25, 3
      %p237 = pnand %p235, %p236
      %p238 = pneg %p237
      // Predicated region
      $region9: #{tpu_custom_call.1} parent=5 // pred_check
        _
      $region10: #{tpu_custom_call.1} parent=5 // pred_check_branch
        %240 = sbr.rel (%p237) target = $region12
      $region11: #{tpu_custom_call.1} parent=5 // pred_region
        %s241 = ssub.s32 %s25, 1
      $region12: #{tpu_custom_call.1} parent=5 // pred_fallthru
        _
      %p242 = scmp.lt.s32.totalorder %s25, 2
      // Predicated region
      $region13: #{tpu_custom_call.1} parent=5 // pred_check
        %p243 = pneg %p242
      $region14: #{tpu_custom_call.1} parent=5 // pred_check_branch
        %245 = sbr.rel (%p243) target = $region16
      $region15: #{tpu_custom_call.1} parent=5 // pred_region
        // Predicated region
        $region17: #{tpu_custom_call.1} parent=15 // pred_check
          %p246 = pneg %p59
        $region18: #{tpu_custom_call.1} parent=15 // pred_check_branch
          %248 = sbr.rel (%p246) target = $region20
        $region19: #{tpu_custom_call.1} parent=15 // pred_region
          %s249 = sand.u32 %s49, 1
          %s250 = scalar_lea.sflag [#allocation3], %s249
          %s251 = sand.u32 %s49, 1
          %s252 = smul.addr %s251, 8
          %s253 = scalar_lea.vmem [#allocation2], %s252
          %255 = vsyncadd %s250, 0
          %s256 = sadd.s32 %s33, %s32
          %s257 = smul.addr %s256, 8
          %s258 = scalar_lea.hbm %s0, %s257
          %s260 = sshll.u32 %s258, 4
          %s261 = int_to_ptr.hbm [resolvable:$true] %s260
          %s262 = sshll.u32 %s253, 4
          %s263 = int_to_ptr.vmem [resolvable:$true] %s262
          %265 = dma.hbm_to_vmem [thread:$0]  %s261, 128, %s263, %s250
        $region20: #{tpu_custom_call.1} parent=15 // pred_fallthru
          _
        // Predicated region
        $region21: #{tpu_custom_call.1} parent=15 // pred_check
          %p266 = pneg %p85
        $region22: #{tpu_custom_call.1} parent=15 // pred_check_branch
          %268 = sbr.rel (%p266) target = $region24
        $region23: #{tpu_custom_call.1} parent=15 // pred_region
          %s269 = sand.u32 %s25, 1
          %s270 = scalar_lea.sflag [#allocation6], %s269
          %s271 = sand.u32 %s75, 1
          %s272 = smul.addr %s271, 128
          %s273 = scalar_lea.vmem [#allocation5], %s272
          %275 = vsyncadd %s270, 0
          %s276 = smul.addr %s32, 16
          %s277 = smul.addr %s276, 8
          %s278 = scalar_lea.hbm %s1, %s277
          %s279 = sshll.u32 %s278, 4
          %s280 = int_to_ptr.hbm [resolvable:$true] %s279
          %s281 = sshll.u32 %s273, 4
          %s282 = int_to_ptr.vmem [resolvable:$true] %s281
          %287 = dma.hbm_to_vmem [thread:$0]  %s280, 2048, %s282, %s270, 128, 128, 8
        $region24: #{tpu_custom_call.1} parent=15 // pred_fallthru
          _
        // Predicated region
        $region25: #{tpu_custom_call.1} parent=15 // pred_check
          %p288 = pneg %p111
        $region26: #{tpu_custom_call.1} parent=15 // pred_check_branch
          %290 = sbr.rel (%p288) target = $region28
        $region27: #{tpu_custom_call.1} parent=15 // pred_region
          %s291 = sand.u32 %s25, 1
          %s292 = scalar_lea.sflag [#allocation6], %s291
          %s293 = sand.u32 %s101, 1
          %s294 = smul.addr %s293, 128
          %s295 = scalar_lea.vmem [#allocation7], %s294
          %297 = vsyncadd %s292, 0
          %s298 = smul.addr %s32, 16
          %s299 = smul.addr %s298, 8
          %s300 = scalar_lea.hbm %s2, %s299
          %s301 = sshll.u32 %s300, 4
          %s302 = int_to_ptr.hbm [resolvable:$true] %s301
          %s303 = sshll.u32 %s295, 4
          %s304 = int_to_ptr.vmem [resolvable:$true] %s303
          %309 = dma.hbm_to_vmem [thread:$0]  %s302, 2048, %s304, %s292, 128, 128, 8
        $region28: #{tpu_custom_call.1} parent=15 // pred_fallthru
          _
        // Predicated region
        $region29: #{tpu_custom_call.1} parent=15 // pred_check
          %p310 = pneg %p137
        $region30: #{tpu_custom_call.1} parent=15 // pred_check_branch
          %312 = sbr.rel (%p310) target = $region32
        $region31: #{tpu_custom_call.1} parent=15 // pred_region
          %p313 = scmp.lt.s32.totalorder %s32, 1
          %s314 = scalar_select %p313, %s32, 1
          %s315 = scalar_lea.vmem %s3, %s314
        $region32: #{tpu_custom_call.1} parent=15 // pred_fallthru
          _
      $region16: #{tpu_custom_call.1} parent=5 // pred_fallthru
        _
      %p316 = scmp.le.s32.totalorder 1, %s25
      %p317 = scmp.lt.s32.totalorder %s25, 3
      %p318 = pnand %p316, %p317
      %p319 = pneg %p318
      // Predicated region
      $region33: #{tpu_custom_call.1} parent=5 // pred_check
        _
      $region34: #{tpu_custom_call.1} parent=5 // pred_check_branch
        %321 = sbr.rel (%p318) target = $region36
      $region35: #{tpu_custom_call.1} parent=5 // pred_region
        %s322 = ssub.s32 %s25, 1
        %s323 = sand.u32 %s52, 1
        %s324 = scalar_lea.sflag [#allocation3], %s323
        %s325 = sand.u32 %s52, 1
        %s326 = smul.addr %s325, 8
        %s327 = scalar_lea.vmem [#allocation2], %s326
        // Predicated region
        $region37: #{tpu_custom_call.1} parent=35 // pred_check
          %p328 = pneg %p65
        $region38: #{tpu_custom_call.1} parent=35 // pred_check_branch
          %330 = sbr.rel (%p328) target = $region40
        $region39: #{tpu_custom_call.1} parent=35 // pred_region
          %332 = dma.done %s324, 128
        $region40: #{tpu_custom_call.1} parent=35 // pred_fallthru
          _
        %s333 = sand.u32 %s30, 1
        %s334 = scalar_lea.sflag [#allocation6], %s333
        %s335 = sand.u32 %s78, 1
        %s336 = smul.addr %s335, 128
        %s337 = scalar_lea.vmem [#allocation5], %s336
        // Predicated region
        $region41: #{tpu_custom_call.1} parent=35 // pred_check
          %p338 = pneg %p91
        $region42: #{tpu_custom_call.1} parent=35 // pred_check_branch
          %340 = sbr.rel (%p338) target = $region44
        $region43: #{tpu_custom_call.1} parent=35 // pred_region
          %342 = dma.done %s334, 2048
        $region44: #{tpu_custom_call.1} parent=35 // pred_fallthru
          _
        %s343 = sand.u32 %s30, 1
        %s344 = scalar_lea.sflag [#allocation6], %s343
        %s345 = sand.u32 %s104, 1
        %s346 = smul.addr %s345, 128
        %s347 = scalar_lea.vmem [#allocation7], %s346
        // Predicated region
        $region45: #{tpu_custom_call.1} parent=35 // pred_check
          %p348 = pneg %p117
        $region46: #{tpu_custom_call.1} parent=35 // pred_check_branch
          %350 = sbr.rel (%p348) target = $region48
        $region47: #{tpu_custom_call.1} parent=35 // pred_region
          %352 = dma.done %s344, 2048
        $region48: #{tpu_custom_call.1} parent=35 // pred_fallthru
          _
        %s353 = sand.u32 %s52, 1
        %s354 = scalar_lea.sflag [#allocation3], %s353
        %s355 = sand.u32 %s52, 1
        %s356 = smul.addr %s355, 8
        %s357 = scalar_lea.vmem [#allocation2], %s356
        %p358 = pneg %p65
        %p359 = pneg %p62
        %s360 = sand.u32 %s30, 1
        %s361 = scalar_lea.sflag [#allocation6], %s360
        %s362 = sand.u32 %s78, 1
        %s363 = smul.addr %s362, 128
        %s364 = scalar_lea.vmem [#allocation5], %s363
        %p365 = pneg %p91
        %p366 = pneg %p88
        %s367 = sand.u32 %s30, 1
        %s368 = scalar_lea.sflag [#allocation6], %s367
        %s369 = sand.u32 %s104, 1
        %s370 = smul.addr %s369, 128
        %s371 = scalar_lea.vmem [#allocation7], %s370
        %p372 = pneg %p117
        %p373 = pneg %p114
        %p374 = scmp.lt.s32.totalorder %s34, 1
        %s375 = scalar_select %p374, %s34, 1
        %s376 = scalar_lea.vmem %s3, %s375
        %p377 = pneg %p143
        %p378 = pneg %p140
        %p379 = pneg %p171
        %p380 = pneg %p168
        %s381 = sand.u32 %s158, 1
        %s382 = scalar_lea.sflag [#allocation4], %s381
        %s383 = sand.u32 %s158, 1
        %s384 = smul.addr %s383, 8
        %s385 = scalar_lea.vmem [#allocation8], %s384
        %p386 = pneg %p199
        %p387 = pneg %p196
        %s388 = sand.u32 %s30, 1
        %s389 = scalar_lea.sflag [#allocation10], %s388
        %s390 = sand.u32 %s186, 1
        %s391 = smul.addr %s390, 8
        %s392 = scalar_lea.vmem [#allocation9], %s391
        %p393 = pneg %p227
        %p394 = pneg %p224
        %s395 = sand.u32 %s30, 1
        %s396 = scalar_lea.sflag [#allocation10], %s395
        %s397 = sand.u32 %s214, 1
        %s398 = smul.addr %s397, 8
        %s399 = scalar_lea.vmem [#allocation11], %s398
        %p400 = scmp.lt.s32.totalorder %s34, 1
        %s401 = scalar_select %p400, %s34, 1
        %s402 = scalar_lea.vmem %s3, %s401
        %v403 = vld [vmem:[%s327] sm:$0xff]
        %v404 = vld [vmem:[%s337] sm:$0xff]
        %v405 = vld [vmem:[%s337 + $0x8] sm:$0xff]
        %v406 = vld [vmem:[%s337 + $0x10] sm:$0xff]
        %v407 = vld [vmem:[%s337 + $0x18] sm:$0xff]
        %v408 = vld [vmem:[%s337 + $0x20] sm:$0xff]
        %v409 = vld [vmem:[%s337 + $0x28] sm:$0xff]
        %v410 = vld [vmem:[%s337 + $0x30] sm:$0xff]
        %v411 = vld [vmem:[%s337 + $0x38] sm:$0xff]
        %v412 = vld [vmem:[%s337 + $0x40] sm:$0xff]
        %v413 = vld [vmem:[%s337 + $0x48] sm:$0xff]
        %v414 = vld [vmem:[%s337 + $0x50] sm:$0xff]
        %v415 = vld [vmem:[%s337 + $0x58] sm:$0xff]
        %v416 = vld [vmem:[%s337 + $0x60] sm:$0xff]
        %v417 = vld [vmem:[%s337 + $0x68] sm:$0xff]
        %v418 = vld [vmem:[%s337 + $0x70] sm:$0xff]
        %v419 = vld [vmem:[%s337 + $0x78] sm:$0xff]
        %v420 = vld [vmem:[%s402] sm:$0x1]
        %v422 = vperm.slane %v420, 0
        %424 = vmatpush.xpose.msra.mxu0 %v419
        %425 = vmatpush.xpose.msra.mxu0 %v418
        %426 = vmatpush.xpose.msra.mxu0 %v417
        %427 = vmatpush.xpose.msra.mxu0 %v416
        %428 = vmatpush.xpose.msra.mxu0 %v415
        %429 = vmatpush.xpose.msra.mxu0 %v414
        %430 = vmatpush.xpose.msra.mxu0 %v413
        %431 = vmatpush.xpose.msra.mxu0 %v412
        %432 = vmatpush.xpose.msra.mxu0 %v411
        %433 = vmatpush.xpose.msra.mxu0 %v410
        %434 = vmatpush.xpose.msra.mxu0 %v409
        %435 = vmatpush.xpose.msra.mxu0 %v408
        %436 = vmatpush.xpose.msra.mxu0 %v407
        %437 = vmatpush.xpose.msra.mxu0 %v406
        %438 = vmatpush.xpose.msra.mxu0 %v405
        %439 = vmatpush.xpose.msra.mxu0 %v404
        %440 = vmatmul.f32.gmra.mxu0 %v403
        %v441 = vpop.f32.mrf.mxu0
        %v442 = vadd.f32 %v422, %v441
        %443 = vdwg.mxu0
        %444 = vmax.xlane.f32.xlu0 %v442
        %v445 = vpop.xlane.xlu0 %444
        %v446 = vsub.f32 %v442, %v445
        %v447 = vmul.f32 %v446, 1.442695
        %v448 = vpow.pop %v447
        %449 = vadd.xlane.f32.xlu0 %v448
        %v450 = vpop.xlane.xlu0 %449
        %v451 = vrcp.pop %v450
        %v452 = vmul.f32 %v450, %v451
        %v453 = vsub.f32 1.0, %v452
        %v454 = vmul.f32 %v451, %v453
        %v455 = vadd.f32 %v451, %v454
        %vm456 = vweird.f32 %v450
        %vm457 = vweird.f32 %v451
        %vm458 = vmor %vm456, %vm457
        %v459 = vsel %vm458, %v451, %v455
        %v460 = vand.u32 2147483647, %v450
        %vm461 = vcmp.eq.f32.partialorder %v460, 8.507059e+37
        %v462 = vand.u32 %v450, 2147483648
        %v463 = vor.u32 1.1754944e-38, %v462
        %v464 = vsel %vm461, %v463, %v459
        %v465 = vmul.f32 %v448, %v464
        %v466 = vld [vmem:[%s347] sm:$0xff]
        %v467 = vld [vmem:[%s347 + $0x8] sm:$0xff]
        %v468 = vld [vmem:[%s347 + $0x10] sm:$0xff]
        %v469 = vld [vmem:[%s347 + $0x18] sm:$0xff]
        %v470 = vld [vmem:[%s347 + $0x20] sm:$0xff]
        %v471 = vld [vmem:[%s347 + $0x28] sm:$0xff]
        %v472 = vld [vmem:[%s347 + $0x30] sm:$0xff]
        %v473 = vld [vmem:[%s347 + $0x38] sm:$0xff]
        %v474 = vld [vmem:[%s347 + $0x40] sm:$0xff]
        %v475 = vld [vmem:[%s347 + $0x48] sm:$0xff]
        %v476 = vld [vmem:[%s347 + $0x50] sm:$0xff]
        %v477 = vld [vmem:[%s347 + $0x58] sm:$0xff]
        %v478 = vld [vmem:[%s347 + $0x60] sm:$0xff]
        %v479 = vld [vmem:[%s347 + $0x68] sm:$0xff]
        %v480 = vld [vmem:[%s347 + $0x70] sm:$0xff]
        %v481 = vld [vmem:[%s347 + $0x78] sm:$0xff]
        %482 = vmatpush.msra.mxu0 %v481
        %483 = vmatpush.msra.mxu0 %v480
        %484 = vmatpush.msra.mxu0 %v479
        %485 = vmatpush.msra.mxu0 %v478
        %486 = vmatpush.msra.mxu0 %v477
        %487 = vmatpush.msra.mxu0 %v476
        %488 = vmatpush.msra.mxu0 %v475
        %489 = vmatpush.msra.mxu0 %v474
        %490 = vmatpush.msra.mxu0 %v473
        %491 = vmatpush.msra.mxu0 %v472
        %492 = vmatpush.msra.mxu0 %v471
        %493 = vmatpush.msra.mxu0 %v470
        %494 = vmatpush.msra.mxu0 %v469
        %495 = vmatpush.msra.mxu0 %v468
        %496 = vmatpush.msra.mxu0 %v467
        %497 = vmatpush.msra.mxu0 %v466
        %498 = vmatmul.f32.gmra.mxu0 %v465
        %v499 = vpop.f32.mrf.mxu0
        %v500 = vadd.f32 0.0, %v499
        %501 = vdwg.mxu0
        %502 = vst [vmem:[%s385] sm:$0xff] %v465
        %503 = vst [vmem:[%s392] sm:$0xff] %v500
        %504 = vst [vmem:[%s399] sm:$0xff] %v442
        %s505 = sand.u32 %s158, 1
        %s506 = scalar_lea.sflag [#allocation4], %s505
        %s507 = sand.u32 %s158, 1
        %s508 = smul.addr %s507, 8
        %s509 = scalar_lea.vmem [#allocation8], %s508
        %s510 = sand.u32 %s30, 1
        %s511 = scalar_lea.sflag [#allocation10], %s510
        %s512 = sand.u32 %s186, 1
        %s513 = smul.addr %s512, 8
        %s514 = scalar_lea.vmem [#allocation9], %s513
        %s515 = sand.u32 %s30, 1
        %s516 = scalar_lea.sflag [#allocation10], %s515
        %s517 = sand.u32 %s214, 1
        %s518 = smul.addr %s517, 8
        %s519 = scalar_lea.vmem [#allocation11], %s518
        // Predicated region
        $region49: #{tpu_custom_call.1} parent=35 // pred_check
          %p520 = pneg %p168
        $region50: #{tpu_custom_call.1} parent=35 // pred_check_branch
          %522 = sbr.rel (%p520) target = $region52
        $region51: #{tpu_custom_call.1} parent=35 // pred_region
          %524 = vsyncadd %s506, 0
          %s525 = sadd.s32 %s35, %s34
          %s526 = smul.addr %s525, 8
          %s527 = scalar_lea.hbm %s4, %s526
          %s529 = sshll.u32 %s509, 4
          %s530 = int_to_ptr.vmem [resolvable:$true] %s529
          %s531 = sshll.u32 %s527, 4
          %s532 = int_to_ptr.hbm [resolvable:$true] %s531
          %534 = dma.vmem_to_hbm [thread:$0]  %s530, 128, %s532, %s506
        $region52: #{tpu_custom_call.1} parent=35 // pred_fallthru
          _
        // Predicated region
        $region53: #{tpu_custom_call.1} parent=35 // pred_check
          %p535 = pneg %p196
        $region54: #{tpu_custom_call.1} parent=35 // pred_check_branch
          %537 = sbr.rel (%p535) target = $region56
        $region55: #{tpu_custom_call.1} parent=35 // pred_region
          %539 = vsyncadd %s511, 0
          %s540 = sadd.s32 %s35, %s34
          %s541 = smul.addr %s540, 8
          %s542 = scalar_lea.hbm %s5, %s541
          %s544 = sshll.u32 %s514, 4
          %s545 = int_to_ptr.vmem [resolvable:$true] %s544
          %s546 = sshll.u32 %s542, 4
          %s547 = int_to_ptr.hbm [resolvable:$true] %s546
          %549 = dma.vmem_to_hbm [thread:$0]  %s545, 128, %s547, %s511
        $region56: #{tpu_custom_call.1} parent=35 // pred_fallthru
          _
        // Predicated region
        $region57: #{tpu_custom_call.1} parent=35 // pred_check
          %p550 = pneg %p224
        $region58: #{tpu_custom_call.1} parent=35 // pred_check_branch
          %552 = sbr.rel (%p550) target = $region60
        $region59: #{tpu_custom_call.1} parent=35 // pred_region
          %554 = vsyncadd %s516, 0
          %s555 = sadd.s32 %s35, %s34
          %s556 = smul.addr %s555, 8
          %s557 = scalar_lea.hbm %s6, %s556
          %s559 = sshll.u32 %s519, 4
          %s560 = int_to_ptr.vmem [resolvable:$true] %s559
          %s561 = sshll.u32 %s557, 4
          %s562 = int_to_ptr.hbm [resolvable:$true] %s561
          %564 = dma.vmem_to_hbm [thread:$0]  %s560, 128, %s562, %s516
        $region60: #{tpu_custom_call.1} parent=35 // pred_fallthru
          _
      $region36: #{tpu_custom_call.1} parent=5 // pred_fallthru
        _
      %p565 = scmp.le.s32.totalorder 2, %s25
      // Predicated region
      $region61: #{tpu_custom_call.1} parent=5 // pred_check
        %p566 = pneg %p565
      $region62: #{tpu_custom_call.1} parent=5 // pred_check_branch
        %568 = sbr.rel (%p566) target = $region64
      $region63: #{tpu_custom_call.1} parent=5 // pred_region
        %s569 = ssub.s32 %s25, 2
        // Predicated region
        $region65: #{tpu_custom_call.1} parent=63 // pred_check
          %p570 = pneg %p174
        $region66: #{tpu_custom_call.1} parent=63 // pred_check_branch
          %572 = sbr.rel (%p570) target = $region68
        $region67: #{tpu_custom_call.1} parent=63 // pred_region
          %s573 = sand.u32 %s159, 1
          %s574 = scalar_lea.sflag [#allocation4], %s573
          %s575 = sand.u32 %s159, 1
          %s576 = smul.addr %s575, 8
          %s577 = scalar_lea.vmem [#allocation8], %s576
          %579 = dma.done %s574, 128
        $region68: #{tpu_custom_call.1} parent=63 // pred_fallthru
          _
        // Predicated region
        $region69: #{tpu_custom_call.1} parent=63 // pred_check
          %p580 = pneg %p202
        $region70: #{tpu_custom_call.1} parent=63 // pred_check_branch
          %582 = sbr.rel (%p580) target = $region72
        $region71: #{tpu_custom_call.1} parent=63 // pred_region
          %s583 = sand.u32 %s31, 1
          %s584 = scalar_lea.sflag [#allocation10], %s583
          %s585 = sand.u32 %s187, 1
          %s586 = smul.addr %s585, 8
          %s587 = scalar_lea.vmem [#allocation9], %s586
          %589 = dma.done %s584, 128
        $region72: #{tpu_custom_call.1} parent=63 // pred_fallthru
          _
        // Predicated region
        $region73: #{tpu_custom_call.1} parent=63 // pred_check
          %p590 = pneg %p230
        $region74: #{tpu_custom_call.1} parent=63 // pred_check_branch
          %592 = sbr.rel (%p590) target = $region76
        $region75: #{tpu_custom_call.1} parent=63 // pred_region
          %s593 = sand.u32 %s31, 1
          %s594 = scalar_lea.sflag [#allocation10], %s593
          %s595 = sand.u32 %s215, 1
          %s596 = smul.addr %s595, 8
          %s597 = scalar_lea.vmem [#allocation11], %s596
          %599 = dma.done %s594, 128
        $region76: #{tpu_custom_call.1} parent=63 // pred_fallthru
          _
      $region64: #{tpu_custom_call.1} parent=5 // pred_fallthru
        _
    $region6: #{tpu_custom_call.1} parent=1 // loop_footer
      %s29 = sadd.s32 1, %s25
    $region7: #{tpu_custom_call.1} parent=1 // loop_footer_branch
      %24 = sbr.rel target = $region3
    $region8: #{tpu_custom_call.1} parent=1 // loop_exit
      _
    %600 = vsyncpa [#allocation3], 1
    %s601 = scalar_lea.sflag [#allocation3], 1
    %602 = vsyncpa %s601, 1
    %603 = vsyncpa [#allocation6], 1
    %s604 = scalar_lea.sflag [#allocation6], 1
    %605 = vsyncpa %s604, 1
    %606 = vsyncpa [#allocation4], 1
    %s607 = scalar_lea.sflag [#allocation4], 1
    %608 = vsyncpa %s607, 1
    %609 = vsyncpa [#allocation10], 1
    %s610 = scalar_lea.sflag [#allocation10], 1
    %611 = vsyncpa %s610, 1

</llo_original>
